<compile_context>
chip_gen: v7x
topology: tpu7x:2x2x1
jax: 0.10.0
libtpu: 0.0.40
codegen_flags: <defaults>
</compile_context>

<pallas_src>
import functools

import jax
import jax.numpy as jnp
from jax.experimental import pallas as pl
from jax.experimental.pallas import tpu as pltpu

# Padded layer widths.
H1 = 8    # fc1 out: 7  -> 8
H2 = 32   # fc2 out: 20 -> 32
H4 = 32   # fc4 out: 20 -> 32
HO = 8    # fc3 out: 1  -> 8 (row 0 is the real output)

# Row offsets inside the packed weight slab (all multiples of 8 -> sublane aligned).
ROW_W1 = 0
ROW_W2 = ROW_W1 + H1          # 8
ROW_W4 = ROW_W2 + H2          # 40
ROW_W3 = ROW_W4 + H4          # 72
ROW_B1 = ROW_W3 + HO          # 80
ROW_B2 = ROW_B1 + H1          # 88
ROW_B4 = ROW_B2 + H2          # 120
SLAB_ROWS = ROW_B4 + H4       # 152


def _round_up(x, m):
    return (x + m - 1) // m * m


def _net_kernel(x_ref, slab_ref, o_ref, *, f_pad):
    """One batch tile: x_ref (f_pad, TB), slab_ref (SLAB_ROWS, C), o_ref (1, TB)."""
    x = x_ref[...]                                                # (f_pad, TB)

    # fc1 + ReLU
    w1 = slab_ref[ROW_W1:ROW_W1 + H1, 0:f_pad]                    # (8, f_pad)
    b1 = slab_ref[ROW_B1:ROW_B1 + H1, 0:1]                        # (8, 1)
    h = jnp.dot(w1, x, preferred_element_type=jnp.float32) + b1
    h = jnp.maximum(h, 0.0)                                       # (8, TB)

    # fc2 + ReLU
    w2 = slab_ref[ROW_W2:ROW_W2 + H2, 0:H1]                       # (32, 8)
    b2 = slab_ref[ROW_B2:ROW_B2 + H2, 0:1]
    h = jnp.dot(w2, h, preferred_element_type=jnp.float32) + b2
    h = jnp.maximum(h, 0.0)                                       # (32, TB)

    # fc4 + ReLU
    w4 = slab_ref[ROW_W4:ROW_W4 + H4, 0:H2]                       # (32, 32)
    b4 = slab_ref[ROW_B4:ROW_B4 + H4, 0:1]
    h = jnp.dot(w4, h, preferred_element_type=jnp.float32) + b4
    h = jnp.maximum(h, 0.0)                                       # (32, TB)

    # fc3 (no bias) + sigmoid * 0.8 + 0.1  — only row 0 of the padded output is real.
    w3 = slab_ref[ROW_W3:ROW_W3 + HO, 0:H4]                       # (8, 32)
    z = jnp.dot(w3, h, preferred_element_type=jnp.float32)        # (8, TB)
    o_ref[...] = jax.nn.sigmoid(z[0:1, :]) * 0.8 + 0.1            # (1, TB) lane-dense


def fake_quant_weight(w, bit_width=3):
    # TODO(synk): brevitas QuantLinear's default weight quantizer has a learned
    # scale; approximated here with symmetric per-tensor max-abs scaling.
    qmax = 2.0 ** (bit_width - 1) - 1.0
    scale = jnp.maximum(jnp.max(jnp.abs(w)), 1e-8) / qmax
    return jnp.clip(jnp.round(w / scale), -qmax, qmax) * scale


def init_params(key, n_features, bit_width=3):
    """PyTorch-style init; weights kept in native (out_features, in_features) layout."""
    def linear(k, fan_in, fan_out, bias=True):
        kw, kb = jax.random.split(k)
        bound = 1.0 / jnp.sqrt(float(fan_in))
        w = jax.random.uniform(kw, (fan_out, fan_in), jnp.float32, -bound, bound)
        w = fake_quant_weight(w, bit_width)
        b = (jax.random.uniform(kb, (fan_out,), jnp.float32, -bound, bound)
             if bias else None)
        return w, b

    k1, k2, k4, k5, k3 = jax.random.split(key, 5)
    w1, b1 = linear(k1, n_features, 7)
    w2, b2 = linear(k2, 7, 20)
    w4, b4 = linear(k4, 20, 20)
    w5, b5 = linear(k5, 20, 20)        # fc5: defined in __init__, unused in forward
    w3, _ = linear(k3, 20, 1, bias=False)
    return dict(w1=w1, b1=b1, w2=w2, b2=b2, w4=w4, b4=b4,
                w5=w5, b5=b5, w3=w3)


def pack_params(params, n_features):
    """Pack all forward-path weights/biases into one zero-padded f32 slab."""
    f_pad = _round_up(n_features, 8)
    cols = max(128, _round_up(f_pad, 128))
    slab = jnp.zeros((SLAB_ROWS, cols), jnp.float32)
    slab = slab.at[ROW_W1:ROW_W1 + 7, :n_features].set(params["w1"])
    slab = slab.at[ROW_W2:ROW_W2 + 20, :7].set(params["w2"])
    slab = slab.at[ROW_W4:ROW_W4 + 20, :20].set(params["w4"])
    slab = slab.at[ROW_W3:ROW_W3 + 1, :20].set(params["w3"])
    slab = slab.at[ROW_B1:ROW_B1 + 7, 0].set(params["b1"])
    slab = slab.at[ROW_B2:ROW_B2 + 20, 0].set(params["b2"])
    slab = slab.at[ROW_B4:ROW_B4 + 20, 0].set(params["b4"])
    return slab


def _pick_batch_tile(batch, f_pad):
    """Largest lane tile (multiple of 128) keeping the double-buffered
    activation block within ~4 MiB; capped at 4096 lanes."""
    budget = 4 * 1024 * 1024
    cap = max(128, (budget // (f_pad * 4 * 2)) // 128 * 128)
    return min(4096, cap, _round_up(max(batch, 1), 128))


def net_forward(x, slab):
    """x: (B, n_features) float32. Returns (B, 1) like the PyTorch module."""
    B, F = x.shape
    f_pad = _round_up(F, 8)
    tb = _pick_batch_tile(B, f_pad)
    b_pad = _round_up(B, tb)

    # Put batch on the lane axis, features on sublanes (zero-padded).
    xt = jnp.zeros((f_pad, b_pad), jnp.float32).at[:F, :B].set(x.T)

    out = pl.pallas_call(
        functools.partial(_net_kernel, f_pad=f_pad),
        out_shape=jax.ShapeDtypeStruct((1, b_pad), jnp.float32),
        grid=(b_pad // tb,),
        in_specs=[
            pl.BlockSpec((f_pad, tb), lambda i: (0, i)),     # activations: tiled over batch
            pl.BlockSpec(slab.shape, lambda i: (0, 0)),      # weight slab: VMEM-resident
        ],
        out_specs=pl.BlockSpec((1, tb), lambda i: (0, i)),   # single-row, lane-dense output
        compiler_params=pltpu.CompilerParams(
            dimension_semantics=("parallel",)),
    )(xt, slab)

    # Drop padded batch columns; present as (B, 1) like the PyTorch module.
    return out[0, :B][:, None]


def net_reference(x, p):
    """Pure-JAX reference (same quantized weights, PyTorch (out,in) layout)."""
    h = jnp.maximum(x @ p["w1"].T + p["b1"], 0.0)
    h = jnp.maximum(h @ p["w2"].T + p["b2"], 0.0)
    h = jnp.maximum(h @ p["w4"].T + p["b4"], 0.0)
    return jax.nn.sigmoid(h @ p["w3"].T) * 0.8 + 0.1


if __name__ == "__main__":
    n_features = 16
    batch = 8

    key = jax.random.PRNGKey(0)
    kx, kp = jax.random.split(key)
    x = jax.random.normal(kx, (batch, n_features), jnp.float32)

    params = init_params(kp, n_features)
    slab = pack_params(params, n_features)

    fwd = jax.jit(net_forward)
    out = jax.block_until_ready(fwd(x, slab))
    ref = net_reference(x, params)

    assert out.shape == (batch, 1), out.shape
    assert jnp.allclose(out, ref, atol=1e-5, rtol=1e-5), (out, ref)

    print("KERNEL_OK")
</pallas_src>

<mosaic_0001>
module attributes {stable_mosaic.version = 11 : i64} {
  func.func @_net_kernel(%arg0: i32, %arg1: memref<16x128xf32, #tpu.memory_space<vmem>>, %arg2: memref<152x128xf32, #tpu.memory_space<vmem>>, %arg3: memref<1x128xf32, #tpu.memory_space<vmem>>) attributes {dimension_semantics = [#tpu.dimension_semantics<parallel>], iteration_bounds = array<i64: 1>, scalar_prefetch = 0 : i64, scratch_operands = 0 : i64, tpu.core_type = #tpu.core_type<tc>, window_params = [{transform_indices = @transform_0, window_bounds = array<i64: 16, 128>}, {pipeline_mode = #tpu.pipeline_mode<synchronous>, transform_indices = @transform_1, window_bounds = array<i64: 152, 128>}, {transform_indices = @transform_2, window_bounds = array<i64: 1, 128>}]} {
    %c0 = arith.constant 0 : index
    %c0_0 = arith.constant 0 : index
    %0 = vector.load %arg1[%c0, %c0_0] : memref<16x128xf32, #tpu.memory_space<vmem>>, vector<16x128xf32>
    %c0_1 = arith.constant 0 : index
    %c0_2 = arith.constant 0 : index
    %1 = vector.load %arg2[%c0_1, %c0_2] : memref<152x128xf32, #tpu.memory_space<vmem>>, vector<8x16xf32>
    %c80 = arith.constant 80 : index
    %c0_3 = arith.constant 0 : index
    %2 = vector.load %arg2[%c80, %c0_3] : memref<152x128xf32, #tpu.memory_space<vmem>>, vector<8x1xf32>
    %cst = arith.constant dense<0.000000e+00> : vector<8x128xf32>
    %3 = tpu.matmul %1, %0, %cst {dimension_numbers = #tpu.dot_dimension_numbers<[1], [0], [0], [1], [0, 0, 1, 1], [], []>} : vector<8x16xf32>, vector<16x128xf32>, vector<8x128xf32> -> vector<8x128xf32>
    %4 = vector.broadcast %2 : vector<8x1xf32> to vector<8x128xf32>
    %5 = arith.addf %3, %4 : vector<8x128xf32>
    %cst_4 = arith.constant 0.000000e+00 : f32
    %6 = vector.broadcast %cst_4 : f32 to vector<8x128xf32>
    %7 = arith.maximumf %5, %6 : vector<8x128xf32>
    %c8 = arith.constant 8 : index
    %c0_5 = arith.constant 0 : index
    %8 = vector.load %arg2[%c8, %c0_5] : memref<152x128xf32, #tpu.memory_space<vmem>>, vector<32x8xf32>
    %c88 = arith.constant 88 : index
    %c0_6 = arith.constant 0 : index
    %9 = vector.load %arg2[%c88, %c0_6] : memref<152x128xf32, #tpu.memory_space<vmem>>, vector<32x1xf32>
    %cst_7 = arith.constant dense<0.000000e+00> : vector<32x128xf32>
    %10 = tpu.matmul %8, %7, %cst_7 {dimension_numbers = #tpu.dot_dimension_numbers<[1], [0], [0], [1], [0, 0, 1, 1], [], []>} : vector<32x8xf32>, vector<8x128xf32>, vector<32x128xf32> -> vector<32x128xf32>
    %11 = vector.broadcast %9 : vector<32x1xf32> to vector<32x128xf32>
    %12 = arith.addf %10, %11 : vector<32x128xf32>
    %cst_8 = arith.constant 0.000000e+00 : f32
    %13 = vector.broadcast %cst_8 : f32 to vector<32x128xf32>
    %14 = arith.maximumf %12, %13 : vector<32x128xf32>
    %c40 = arith.constant 40 : index
    %c0_9 = arith.constant 0 : index
    %15 = vector.load %arg2[%c40, %c0_9] : memref<152x128xf32, #tpu.memory_space<vmem>>, vector<32x32xf32>
    %c120 = arith.constant 120 : index
    %c0_10 = arith.constant 0 : index
    %16 = vector.load %arg2[%c120, %c0_10] : memref<152x128xf32, #tpu.memory_space<vmem>>, vector<32x1xf32>
    %cst_11 = arith.constant dense<0.000000e+00> : vector<32x128xf32>
    %17 = tpu.matmul %15, %14, %cst_11 {dimension_numbers = #tpu.dot_dimension_numbers<[1], [0], [0], [1], [0, 0, 1, 1], [], []>} : vector<32x32xf32>, vector<32x128xf32>, vector<32x128xf32> -> vector<32x128xf32>
    %18 = vector.broadcast %16 : vector<32x1xf32> to vector<32x128xf32>
    %19 = arith.addf %17, %18 : vector<32x128xf32>
    %cst_12 = arith.constant 0.000000e+00 : f32
    %20 = vector.broadcast %cst_12 : f32 to vector<32x128xf32>
    %21 = arith.maximumf %19, %20 : vector<32x128xf32>
    %c72 = arith.constant 72 : index
    %c0_13 = arith.constant 0 : index
    %22 = vector.load %arg2[%c72, %c0_13] : memref<152x128xf32, #tpu.memory_space<vmem>>, vector<8x32xf32>
    %cst_14 = arith.constant dense<0.000000e+00> : vector<8x128xf32>
    %23 = tpu.matmul %22, %21, %cst_14 {dimension_numbers = #tpu.dot_dimension_numbers<[1], [0], [0], [1], [0, 0, 1, 1], [], []>} : vector<8x32xf32>, vector<32x128xf32>, vector<8x128xf32> -> vector<8x128xf32>
    %24 = vector.extract_strided_slice %23 {offsets = [0, 0], sizes = [1, 128], strides = [1, 1]} : vector<8x128xf32> to vector<1x128xf32>
    %25 = arith.negf %24 : vector<1x128xf32>
    %26 = math.exp %25 : vector<1x128xf32>
    %cst_15 = arith.constant 1.000000e+00 : f32
    %27 = vector.broadcast %cst_15 : f32 to vector<1x128xf32>
    %28 = arith.addf %27, %26 : vector<1x128xf32>
    %29 = arith.divf %27, %28 : vector<1x128xf32>
    %cst_16 = arith.constant 8.000000e-01 : f32
    %30 = vector.broadcast %cst_16 : f32 to vector<1x128xf32>
    %31 = arith.mulf %29, %30 : vector<1x128xf32>
    %cst_17 = arith.constant 1.000000e-01 : f32
    %32 = vector.broadcast %cst_17 : f32 to vector<1x128xf32>
    %33 = arith.addf %31, %32 : vector<1x128xf32>
    %c0_18 = arith.constant 0 : index
    %c0_19 = arith.constant 0 : index
    %34 = vector.load %arg3[%c0_18, %c0_19] : memref<1x128xf32, #tpu.memory_space<vmem>>, vector<1x128xf32>
    tpu.vector_store %arg3[%c0_18, %c0_19], %33 {strides = array<i32>} : memref<1x128xf32, #tpu.memory_space<vmem>>, vector<1x128xf32>,
    return
  }
  func.func @transform_0(%arg0: i32) -> (i32, i32) {
    %c0_i32 = arith.constant 0 : i32
    %c0_i32_0 = arith.constant 0 : i32
    return %c0_i32, %arg0 : i32, i32
  }
  func.func @transform_1(%arg0: i32) -> (i32, i32) {
    %c0_i32 = arith.constant 0 : i32
    %c0_i32_0 = arith.constant 0 : i32
    %c0_i32_1 = arith.constant 0 : i32
    return %c0_i32, %c0_i32_0 : i32, i32
  }
  func.func @transform_2(%arg0: i32) -> (i32, i32) {
    %c0_i32 = arith.constant 0 : i32
    %c0_i32_0 = arith.constant 0 : i32
    return %c0_i32, %arg0 : i32, i32
  }
}

</mosaic_0001>

<llo_original>
// kernel: net_forward.1
$region0: #{net_forward.1}
  #allocation0 [shape = 'u32[]', space=smem, size = 0x4, offset = 0x4, fixed_abs, tag = 'smem constant byte address 0x4 - core index']
  #allocation1 [shape = 'u32[144,128]{1,0:T(1,128)}', space=vmem, size = 0x12000, scoped, tag = 'internal scratch']
  %s0 = inlined_call_operand.vmem [shape: f32[16,128], index: 0, kind: input, shape index: {}]
  %s1 = inlined_call_operand.hbm [shape: f32[152,128], index: 1, kind: input, shape index: {}]
  %s2 = inlined_call_operand.vmem [shape: f32[1,128], index: 2, kind: output, shape index: {}]
  %s3 = sld [smem:[#allocation0]]
  $region22: #{net_forward.1} parent=0
    _
  %s5 = ssub.s32 1, %s3
  %s6 = scalar_select 0, %s5, %s3
  $region1: #{net_forward.1} parent=0
    #allocation2 [shape = 'u8[77824]{0}', space=vmem, size = 0x13000, scoped, tag = 'input window, operand 1, single buffered']
    #allocation3 [shape = 's32[1]{0}', space=sflag, size = 0x4, scoped, tag = 'scoped memory for net_forward.1']
    %7 = vsyncpa [#allocation3], 0
    // Predicated region
    $region2: #{net_forward.1} parent=1 // pred_check
      _
    $region3: #{net_forward.1} parent=1 // pred_check_branch
      %9 = sbr.rel (0) target = $region5
    $region4: #{net_forward.1} parent=1 // pred_region
      _
    $region5: #{net_forward.1} parent=1 // pred_fallthru
      _
    // Predicated region
    $region6: #{net_forward.1} parent=1 // pred_check
      _
    $region7: #{net_forward.1} parent=1 // pred_check_branch
      %11 = sbr.rel (0) target = $region9
    $region8: #{net_forward.1} parent=1 // pred_region
      %s13 = ssub.s32 2432, 2432
      %14 = vsyncadd [#allocation3], %s13
      %s15 = sshll.u32 [#allocation2], 4
      %s16 = int_to_ptr.vmem [resolvable:$true] %s15
      %21 = dma.hbm_to_vmem [thread:$0]  %s1, 2432, %s16, [#allocation3], 128, 128, 8
    $region9: #{net_forward.1} parent=1 // pred_fallthru
      _
    // Predicated region
    $region10: #{net_forward.1} parent=1 // pred_check
      _
    $region11: #{net_forward.1} parent=1 // pred_check_branch
      %23 = sbr.rel (0) target = $region13
    $region12: #{net_forward.1} parent=1 // pred_region
      %24 = dma.done [#allocation3], 2432
    $region13: #{net_forward.1} parent=1 // pred_fallthru
      _
    %v25 = vld [vmem:[%s0] sm:$0xff]
    %v26 = vld [vmem:[%s0 + $0x8] sm:$0xff]
    %v27 = vld [vmem:[#allocation2] sm:$0xff]
    %v28 = vld [vmem:[#allocation2 + $0x50] sm:$0xff]
    %30 = vset.pattern.permute.xlu0 0
    %31 = vperm.xlu0 %30, %v28
    %v32 = vpop.permute.xlu0 %31
    %vm34 = vcmask 130048
    %v36 = vsel %vm34, %v27, 0
    %38 = vmatprep.subr.mxu0 0.0
    %39 = vmatpush1.msra.mxu0 %v25
    %40 = vmatprep.subr.mxu0 0.0
    %41 = vmatpush1.msra.mxu0 %v26
    %42 = vmatprep.subr.mxu0 0.0
    %43 = vmatpush1.msra.mxu0 0.0
    %44 = vmatprep.subr.mxu0 0.0
    %45 = vmatpush1.msra.mxu0 0.0
    %46 = vmatprep.subr.mxu0 0.0
    %47 = vmatpush1.msra.mxu0 0.0
    %48 = vmatprep.subr.mxu0 0.0
    %49 = vmatpush1.msra.mxu0 0.0
    %50 = vmatprep.subr.mxu0 0.0
    %51 = vmatpush1.msra.mxu0 0.0
    %52 = vmatprep.subr.mxu0 0.0
    %53 = vmatpush1.msra.mxu0 0.0
    %54 = vmatprep.subr.mxu0 0.0
    %55 = vmatpush1.msra.mxu0 0.0
    %56 = vmatprep.subr.mxu0 0.0
    %57 = vmatpush1.msra.mxu0 0.0
    %58 = vmatprep.subr.mxu0 0.0
    %59 = vmatpush1.msra.mxu0 0.0
    %60 = vmatprep.subr.mxu0 0.0
    %61 = vmatpush1.msra.mxu0 0.0
    %62 = vmatprep.subr.mxu0 0.0
    %63 = vmatpush1.msra.mxu0 0.0
    %64 = vmatprep.subr.mxu0 0.0
    %65 = vmatpush1.msra.mxu0 0.0
    %66 = vmatprep.subr.mxu0 0.0
    %67 = vmatpush1.msra.mxu0 0.0
    %68 = vmatprep.subr.mxu0 0.0
    %69 = vmatpush1.msra.mxu0 0.0
    %70 = vmatprep.subr.mxu0 0.0
    %71 = vmatpush1.msra.mxu0 0.0
    %72 = vmatprep.subr.mxu0 0.0
    %73 = vmatpush1.msra.mxu0 0.0
    %74 = vmatprep.subr.mxu0 0.0
    %75 = vmatpush1.msra.mxu0 0.0
    %76 = vmatprep.subr.mxu0 0.0
    %77 = vmatpush1.msra.mxu0 0.0
    %78 = vmatprep.subr.mxu0 0.0
    %79 = vmatpush1.msra.mxu0 0.0
    %80 = vmatprep.subr.mxu0 0.0
    %81 = vmatpush1.msra.mxu0 0.0
    %82 = vmatprep.subr.mxu0 0.0
    %83 = vmatpush1.msra.mxu0 0.0
    %84 = vmatprep.subr.mxu0 0.0
    %85 = vmatpush1.msra.mxu0 0.0
    %86 = vmatprep.subr.mxu0 0.0
    %87 = vmatpush1.msra.mxu0 0.0
    %88 = vmatprep.subr.mxu0 0.0
    %89 = vmatpush1.msra.mxu0 0.0
    %90 = vmatprep.subr.mxu0 0.0
    %91 = vmatpush1.msra.mxu0 0.0
    %92 = vmatprep.subr.mxu0 0.0
    %93 = vmatpush1.msra.mxu0 0.0
    %94 = vmatprep.subr.mxu0 0.0
    %95 = vmatpush1.msra.mxu0 0.0
    %96 = vmatprep.subr.mxu0 0.0
    %97 = vmatpush1.msra.mxu0 0.0
    %98 = vmatprep.subr.mxu0 0.0
    %99 = vmatpush1.msra.mxu0 0.0
    %100 = vmatprep.subr.mxu0 0.0
    %101 = vmatpush1.msra.mxu0 0.0
    %102 = vmatprep.mubr.f32.mxu0 0.0
    %103 = vmatmul.mubr.f32.gmra.mrb[0].mxu0 %v36
    %v104 = vpop.f32.mrb[0].mxu0
    %v105 = vadd.f32 %v32, %v104
    %v106 = vpop.f32.mrb[0].mxu0
    %107 = vdwg.mxu0
    %v108 = vmax.f32 %v105, 0.0
    %v109 = vld [vmem:[#allocation2 + $0x8] sm:$0xff]
    %v110 = vld [vmem:[#allocation2 + $0x10] sm:$0xff]
    %v111 = vld [vmem:[#allocation2 + $0x18] sm:$0xff]
    %v112 = vld [vmem:[#allocation2 + $0x20] sm:$0xff]
    %v113 = vld [vmem:[#allocation2 + $0x58] sm:$0xff]
    %v114 = vld [vmem:[#allocation2 + $0x60] sm:$0xff]
    %v115 = vld [vmem:[#allocation2 + $0x68] sm:$0xff]
    %v116 = vld [vmem:[#allocation2 + $0x70] sm:$0xff]
    %118 = vset.pattern.permute.xlu0 0
    %119 = vperm.xlu0 %118, %v113
    %v120 = vpop.permute.xlu0 %119
    %123 = vset.pattern.permute.xlu0 0
    %124 = vperm.xlu0 %123, %v114
    %v125 = vpop.permute.xlu0 %124
    %128 = vset.pattern.permute.xlu0 0
    %129 = vperm.xlu0 %128, %v115
    %v130 = vpop.permute.xlu0 %129
    %133 = vset.pattern.permute.xlu0 0
    %134 = vperm.xlu0 %133, %v116
    %v135 = vpop.permute.xlu0 %134
    %vm137 = vcmask 64512
    %v139 = vsel %vm137, %v109, 0
    %v142 = vsel %vm137, %v110, 0
    %v145 = vsel %vm137, %v111, 0
    %v148 = vsel %vm137, %v112, 0
    %150 = vmatprep.subr.mxu0 0.0
    %151 = vmatpush1.msra.mxu0 %v108
    %152 = vmatprep.subr.mxu0 0.0
    %153 = vmatpush1.msra.mxu0 0.0
    %154 = vmatprep.subr.mxu0 0.0
    %155 = vmatpush1.msra.mxu0 0.0
    %156 = vmatprep.subr.mxu0 0.0
    %157 = vmatpush1.msra.mxu0 0.0
    %158 = vmatprep.subr.mxu0 0.0
    %159 = vmatpush1.msra.mxu0 0.0
    %160 = vmatprep.subr.mxu0 0.0
    %161 = vmatpush1.msra.mxu0 0.0
    %162 = vmatprep.subr.mxu0 0.0
    %163 = vmatpush1.msra.mxu0 0.0
    %164 = vmatprep.subr.mxu0 0.0
    %165 = vmatpush1.msra.mxu0 0.0
    %166 = vmatprep.subr.mxu0 0.0
    %167 = vmatpush1.msra.mxu0 0.0
    %168 = vmatprep.subr.mxu0 0.0
    %169 = vmatpush1.msra.mxu0 0.0
    %170 = vmatprep.subr.mxu0 0.0
    %171 = vmatpush1.msra.mxu0 0.0
    %172 = vmatprep.subr.mxu0 0.0
    %173 = vmatpush1.msra.mxu0 0.0
    %174 = vmatprep.subr.mxu0 0.0
    %175 = vmatpush1.msra.mxu0 0.0
    %176 = vmatprep.subr.mxu0 0.0
    %177 = vmatpush1.msra.mxu0 0.0
    %178 = vmatprep.subr.mxu0 0.0
    %179 = vmatpush1.msra.mxu0 0.0
    %180 = vmatprep.subr.mxu0 0.0
    %181 = vmatpush1.msra.mxu0 0.0
    %182 = vmatprep.subr.mxu0 0.0
    %183 = vmatpush1.msra.mxu0 0.0
    %184 = vmatprep.subr.mxu0 0.0
    %185 = vmatpush1.msra.mxu0 0.0
    %186 = vmatprep.subr.mxu0 0.0
    %187 = vmatpush1.msra.mxu0 0.0
    %188 = vmatprep.subr.mxu0 0.0
    %189 = vmatpush1.msra.mxu0 0.0
    %190 = vmatprep.subr.mxu0 0.0
    %191 = vmatpush1.msra.mxu0 0.0
    %192 = vmatprep.subr.mxu0 0.0
    %193 = vmatpush1.msra.mxu0 0.0
    %194 = vmatprep.subr.mxu0 0.0
    %195 = vmatpush1.msra.mxu0 0.0
    %196 = vmatprep.subr.mxu0 0.0
    %197 = vmatpush1.msra.mxu0 0.0
    %198 = vmatprep.subr.mxu0 0.0
    %199 = vmatpush1.msra.mxu0 0.0
    %200 = vmatprep.subr.mxu0 0.0
    %201 = vmatpush1.msra.mxu0 0.0
    %202 = vmatprep.subr.mxu0 0.0
    %203 = vmatpush1.msra.mxu0 0.0
    %204 = vmatprep.subr.mxu0 0.0
    %205 = vmatpush1.msra.mxu0 0.0
    %206 = vmatprep.subr.mxu0 0.0
    %207 = vmatpush1.msra.mxu0 0.0
    %208 = vmatprep.subr.mxu0 0.0
    %209 = vmatpush1.msra.mxu0 0.0
    %210 = vmatprep.subr.mxu0 0.0
    %211 = vmatpush1.msra.mxu0 0.0
    %212 = vmatprep.subr.mxu0 0.0
    %213 = vmatpush1.msra.mxu0 0.0
    %214 = vmatprep.mubr.f32.mxu0 0.0
    %215 = vmatmul.mubr.f32.gmra.mrb[0].mxu0 %v139
    %v216 = vpop.f32.mrb[0].mxu0
    %v217 = vadd.f32 %v120, %v216
    %v218 = vpop.f32.mrb[0].mxu0
    %219 = vmatprep.mubr.f32.mxu0 0.0
    %220 = vmatmul.mubr.f32.gmra.mrb[0].mxu0 %v142
    %v221 = vpop.f32.mrb[0].mxu0
    %v222 = vadd.f32 %v125, %v221
    %v223 = vpop.f32.mrb[0].mxu0
    %224 = vmatprep.mubr.f32.mxu0 0.0
    %225 = vmatmul.mubr.f32.gmra.mrb[0].mxu0 %v145
    %v226 = vpop.f32.mrb[0].mxu0
    %v227 = vadd.f32 %v130, %v226
    %v228 = vpop.f32.mrb[0].mxu0
    %229 = vmatprep.mubr.f32.mxu0 0.0
    %230 = vmatmul.mubr.f32.gmra.mrb[0].mxu0 %v148
    %v231 = vpop.f32.mrb[0].mxu0
    %v232 = vadd.f32 %v135, %v231
    %v233 = vpop.f32.mrb[0].mxu0
    %234 = vdwg.mxu0
    %v235 = vmax.f32 %v217, 0.0
    %v236 = vmax.f32 %v222, 0.0
    %v237 = vmax.f32 %v227, 0.0
    %v238 = vmax.f32 %v232, 0.0
    %v239 = vld [vmem:[#allocation2 + $0x28] sm:$0xff]
    %v240 = vld [vmem:[#allocation2 + $0x30] sm:$0xff]
    %v241 = vld [vmem:[#allocation2 + $0x38] sm:$0xff]
    %v242 = vld [vmem:[#allocation2 + $0x40] sm:$0xff]
    %v243 = vld [vmem:[#allocation2 + $0x78] sm:$0xff]
    %v244 = vld [vmem:[#allocation2 + $0x80] sm:$0xff]
    %v245 = vld [vmem:[#allocation2 + $0x88] sm:$0xff]
    %v246 = vld [vmem:[#allocation2 + $0x90] sm:$0xff]
    %248 = vset.pattern.permute.xlu0 0
    %249 = vperm.xlu0 %248, %v243
    %v250 = vpop.permute.xlu0 %249
    %253 = vset.pattern.permute.xlu0 0
    %254 = vperm.xlu0 %253, %v244
    %v255 = vpop.permute.xlu0 %254
    %258 = vset.pattern.permute.xlu0 0
    %259 = vperm.xlu0 %258, %v245
    %v260 = vpop.permute.xlu0 %259
    %263 = vset.pattern.permute.xlu0 0
    %264 = vperm.xlu0 %263, %v246
    %v265 = vpop.permute.xlu0 %264
    %vm267 = vcmask 261120
    %v269 = vsel %vm267, %v239, 0
    %v272 = vsel %vm267, %v240, 0
    %v275 = vsel %vm267, %v241, 0
    %v278 = vsel %vm267, %v242, 0
    %280 = vmatprep.subr.mxu0 0.0
    %281 = vmatpush1.msra.mxu0 %v235
    %282 = vmatprep.subr.mxu0 0.0
    %283 = vmatpush1.msra.mxu0 %v236
    %284 = vmatprep.subr.mxu0 0.0
    %285 = vmatpush1.msra.mxu0 %v237
    %286 = vmatprep.subr.mxu0 0.0
    %287 = vmatpush1.msra.mxu0 %v238
    %288 = vmatprep.subr.mxu0 0.0
    %289 = vmatpush1.msra.mxu0 0.0
    %290 = vmatprep.subr.mxu0 0.0
    %291 = vmatpush1.msra.mxu0 0.0
    %292 = vmatprep.subr.mxu0 0.0
    %293 = vmatpush1.msra.mxu0 0.0
    %294 = vmatprep.subr.mxu0 0.0
    %295 = vmatpush1.msra.mxu0 0.0
    %296 = vmatprep.subr.mxu0 0.0
    %297 = vmatpush1.msra.mxu0 0.0
    %298 = vmatprep.subr.mxu0 0.0
    %299 = vmatpush1.msra.mxu0 0.0
    %300 = vmatprep.subr.mxu0 0.0
    %301 = vmatpush1.msra.mxu0 0.0
    %302 = vmatprep.subr.mxu0 0.0
    %303 = vmatpush1.msra.mxu0 0.0
    %304 = vmatprep.subr.mxu0 0.0
    %305 = vmatpush1.msra.mxu0 0.0
    %306 = vmatprep.subr.mxu0 0.0
    %307 = vmatpush1.msra.mxu0 0.0
    %308 = vmatprep.subr.mxu0 0.0
    %309 = vmatpush1.msra.mxu0 0.0
    %310 = vmatprep.subr.mxu0 0.0
    %311 = vmatpush1.msra.mxu0 0.0
    %312 = vmatprep.subr.mxu0 0.0
    %313 = vmatpush1.msra.mxu0 0.0
    %314 = vmatprep.subr.mxu0 0.0
    %315 = vmatpush1.msra.mxu0 0.0
    %316 = vmatprep.subr.mxu0 0.0
    %317 = vmatpush1.msra.mxu0 0.0
    %318 = vmatprep.subr.mxu0 0.0
    %319 = vmatpush1.msra.mxu0 0.0
    %320 = vmatprep.subr.mxu0 0.0
    %321 = vmatpush1.msra.mxu0 0.0
    %322 = vmatprep.subr.mxu0 0.0
    %323 = vmatpush1.msra.mxu0 0.0
    %324 = vmatprep.subr.mxu0 0.0
    %325 = vmatpush1.msra.mxu0 0.0
    %326 = vmatprep.subr.mxu0 0.0
    %327 = vmatpush1.msra.mxu0 0.0
    %328 = vmatprep.subr.mxu0 0.0
    %329 = vmatpush1.msra.mxu0 0.0
    %330 = vmatprep.subr.mxu0 0.0
    %331 = vmatpush1.msra.mxu0 0.0
    %332 = vmatprep.subr.mxu0 0.0
    %333 = vmatpush1.msra.mxu0 0.0
    %334 = vmatprep.subr.mxu0 0.0
    %335 = vmatpush1.msra.mxu0 0.0
    %336 = vmatprep.subr.mxu0 0.0
    %337 = vmatpush1.msra.mxu0 0.0
    %338 = vmatprep.subr.mxu0 0.0
    %339 = vmatpush1.msra.mxu0 0.0
    %340 = vmatprep.subr.mxu0 0.0
    %341 = vmatpush1.msra.mxu0 0.0
    %342 = vmatprep.subr.mxu0 0.0
    %343 = vmatpush1.msra.mxu0 0.0
    %344 = vmatprep.mubr.f32.mxu0 0.0
    %345 = vmatmul.mubr.f32.gmra.mrb[0].mxu0 %v269
    %v346 = vpop.f32.mrb[0].mxu0
    %v347 = vadd.f32 %v250, %v346
    %v348 = vpop.f32.mrb[0].mxu0
    %349 = vmatprep.mubr.f32.mxu0 0.0
    %350 = vmatmul.mubr.f32.gmra.mrb[0].mxu0 %v272
    %v351 = vpop.f32.mrb[0].mxu0
    %v352 = vadd.f32 %v255, %v351
    %v353 = vpop.f32.mrb[0].mxu0
    %354 = vmatprep.mubr.f32.mxu0 0.0
    %355 = vmatmul.mubr.f32.gmra.mrb[0].mxu0 %v275
    %v356 = vpop.f32.mrb[0].mxu0
    %v357 = vadd.f32 %v260, %v356
    %v358 = vpop.f32.mrb[0].mxu0
    %359 = vmatprep.mubr.f32.mxu0 0.0
    %360 = vmatmul.mubr.f32.gmra.mrb[0].mxu0 %v278
    %v361 = vpop.f32.mrb[0].mxu0
    %v362 = vadd.f32 %v265, %v361
    %v363 = vpop.f32.mrb[0].mxu0
    %364 = vdwg.mxu0
    %v365 = vmax.f32 %v347, 0.0
    %v366 = vmax.f32 %v352, 0.0
    %v367 = vmax.f32 %v357, 0.0
    %v368 = vmax.f32 %v362, 0.0
    %v369 = vld [vmem:[#allocation2 + $0x48] sm:$0xff]
    %v371 = vsel %vm267, %v369, 0
    %373 = vmatprep.subr.mxu0 0.0
    %374 = vmatpush1.msra.mxu0 %v365
    %375 = vmatprep.subr.mxu0 0.0
    %376 = vmatpush1.msra.mxu0 %v366
    %377 = vmatprep.subr.mxu0 0.0
    %378 = vmatpush1.msra.mxu0 %v367
    %379 = vmatprep.subr.mxu0 0.0
    %380 = vmatpush1.msra.mxu0 %v368
    %381 = vmatprep.subr.mxu0 0.0
    %382 = vmatpush1.msra.mxu0 0.0
    %383 = vmatprep.subr.mxu0 0.0
    %384 = vmatpush1.msra.mxu0 0.0
    %385 = vmatprep.subr.mxu0 0.0
    %386 = vmatpush1.msra.mxu0 0.0
    %387 = vmatprep.subr.mxu0 0.0
    %388 = vmatpush1.msra.mxu0 0.0
    %389 = vmatprep.subr.mxu0 0.0
    %390 = vmatpush1.msra.mxu0 0.0
    %391 = vmatprep.subr.mxu0 0.0
    %392 = vmatpush1.msra.mxu0 0.0
    %393 = vmatprep.subr.mxu0 0.0
    %394 = vmatpush1.msra.mxu0 0.0
    %395 = vmatprep.subr.mxu0 0.0
    %396 = vmatpush1.msra.mxu0 0.0
    %397 = vmatprep.subr.mxu0 0.0
    %398 = vmatpush1.msra.mxu0 0.0
    %399 = vmatprep.subr.mxu0 0.0
    %400 = vmatpush1.msra.mxu0 0.0
    %401 = vmatprep.subr.mxu0 0.0
    %402 = vmatpush1.msra.mxu0 0.0
    %403 = vmatprep.subr.mxu0 0.0
    %404 = vmatpush1.msra.mxu0 0.0
    %405 = vmatprep.subr.mxu0 0.0
    %406 = vmatpush1.msra.mxu0 0.0
    %407 = vmatprep.subr.mxu0 0.0
    %408 = vmatpush1.msra.mxu0 0.0
    %409 = vmatprep.subr.mxu0 0.0
    %410 = vmatpush1.msra.mxu0 0.0
    %411 = vmatprep.subr.mxu0 0.0
    %412 = vmatpush1.msra.mxu0 0.0
    %413 = vmatprep.subr.mxu0 0.0
    %414 = vmatpush1.msra.mxu0 0.0
    %415 = vmatprep.subr.mxu0 0.0
    %416 = vmatpush1.msra.mxu0 0.0
    %417 = vmatprep.subr.mxu0 0.0
    %418 = vmatpush1.msra.mxu0 0.0
    %419 = vmatprep.subr.mxu0 0.0
    %420 = vmatpush1.msra.mxu0 0.0
    %421 = vmatprep.subr.mxu0 0.0
    %422 = vmatpush1.msra.mxu0 0.0
    %423 = vmatprep.subr.mxu0 0.0
    %424 = vmatpush1.msra.mxu0 0.0
    %425 = vmatprep.subr.mxu0 0.0
    %426 = vmatpush1.msra.mxu0 0.0
    %427 = vmatprep.subr.mxu0 0.0
    %428 = vmatpush1.msra.mxu0 0.0
    %429 = vmatprep.subr.mxu0 0.0
    %430 = vmatpush1.msra.mxu0 0.0
    %431 = vmatprep.subr.mxu0 0.0
    %432 = vmatpush1.msra.mxu0 0.0
    %433 = vmatprep.subr.mxu0 0.0
    %434 = vmatpush1.msra.mxu0 0.0
    %435 = vmatprep.subr.mxu0 0.0
    %436 = vmatpush1.msra.mxu0 0.0
    %437 = vmatprep.mubr.f32.mxu0 0.0
    %438 = vmatmul.mubr.f32.gmra.mrb[0].mxu0 %v371
    %v439 = vpop.f32.mrb[0].mxu0
    %v440 = vadd.f32 0.0, %v439
    %v441 = vpop.f32.mrb[0].mxu0
    %442 = vdwg.mxu0
    %v443 = vxor.u32 %v440, 2147483648
    %v444 = vmul.f32 %v443, 1.442695
    %v445 = vpow.pop %v444
    %v446 = vadd.f32 %v445, 1.0
    %v447 = vrcp.pop %v446
    %v448 = vmul.f32 1.0, %v447
    %v449 = vmul.f32 %v448, 0.8
    %v450 = vadd.f32 %v449, 0.1
    %451 = vst [vmem:[%s2] sm:$0x1] %v450
    // Predicated region
    $region14: #{net_forward.1} parent=1 // pred_check
      _
    $region15: #{net_forward.1} parent=1 // pred_check_branch
      %453 = sbr.rel (0) target = $region17
    $region16: #{net_forward.1} parent=1 // pred_region
      _
    $region17: #{net_forward.1} parent=1 // pred_fallthru
      _
    // Predicated region
    $region18: #{net_forward.1} parent=1 // pred_check
      _
    $region19: #{net_forward.1} parent=1 // pred_check_branch
      %455 = sbr.rel (0) target = $region21
    $region20: #{net_forward.1} parent=1 // pred_region
      _
    $region21: #{net_forward.1} parent=1 // pred_fallthru
      _
    %456 = vsyncpa [#allocation3], 1

</llo_original>
